<compile_context>
chip_gen: v5e
topology: v5e:2x2
jax: 0.10.0
libtpu: 0.0.40
codegen_flags: <defaults>
</compile_context>

<pallas_src>
import functools

import jax
import jax.numpy as jnp
from jax.experimental import pallas as pl
from jax.experimental.pallas import tpu as pltpu

MARGIN = 0.2
ALPHA = 1.0
BETA = 1.0
EPS = 1e-6  # torch.pairwise_distance eps (added to the difference)


def _weighted_triplet_kernel(w_ref, a_ref, p_ref, n_ref, o_ref, *,
                             batch, block_rows, margin, needs_mask):
    """One batch tile: (tb, D) embeddings -> lane-dense (1, 1, 128) partial sum."""
    # Upcast in-register/in-VMEM (bf16 on the wire; math in f32).  d_ap is
    # fully reduced before `negative` is touched so the peak number of live
    # (tb, D) f32 temporaries stays ~2 (VMEM headroom, esp. on v7x).
    a = a_ref[...].astype(jnp.float32)
    d_ap = jnp.sqrt(jnp.sum(
        jnp.square(a - p_ref[...].astype(jnp.float32) + EPS),
        axis=-1, keepdims=True))                                     # (tb, 1)
    d_an = jnp.sqrt(jnp.sum(
        jnp.square(a - n_ref[...].astype(jnp.float32) + EPS),
        axis=-1, keepdims=True))                                     # (tb, 1)
    base = jnp.maximum(d_ap - d_an + margin, 0.0)                    # (tb, 1)

    if needs_mask:
        # Load-bearing when B % tb != 0: OOB rows of the padded final block
        # are undefined (possibly NaN/Inf); mask `base` before weighting.
        # Compiled out entirely when the batch divides evenly.
        i = pl.program_id(0)
        rows = i * block_rows + jax.lax.broadcasted_iota(
            jnp.int32, (block_rows, 1), 0)
        base = jnp.where(rows < batch, base, 0.0)

    # Weighted partial sum for this tile: (1, tb) @ (tb, 1) -> (1, 1).
    # Kept on the MXU: avoids a lane<->sublane relayout of w or base, and the
    # MXU has full slack in this memory-bound kernel.
    psum = jnp.dot(w_ref[...], base, preferred_element_type=jnp.float32)

    # Lane-dense store; the wrapper reads lane 0 of each tile row.
    o_ref[...] = jnp.broadcast_to(psum, o_ref.shape)                 # (1,1,128)


def _round_up(x, m):
    return ((x + m - 1) // m) * m


def _vmem_capacity_bytes():
    """Physical VMEM per TensorCore; conservative fallback if query fails."""
    try:
        return int(pltpu.get_tpu_info().vmem_capacity_bytes)
    except Exception:
        return 64 * 1024 * 1024  # v7x per-TC size (most restrictive)


def _choose_block_rows(batch, dim, itemsize, vmem_capacity):
    """Rows per grid step.

    Per-input block target ~4 MiB on 128-MiB-VMEM chips (v5e/v6e), ~2 MiB on
    64-MiB chips (v7x).  Clamped so num_tiles >= 2 for large batches (feeds
    both v7x TensorCores via the 'parallel' axis), multiple of 128 whenever
    num_tiles > 1 (lane legality of the weight row / sublane alignment of the
    embedding blocks), and exactly `batch` for the single-tile case.
    """
    big_vmem = vmem_capacity >= 96 * 1024 * 1024
    target_bytes = (4 if big_vmem else 2) * 1024 * 1024
    row_bytes = max(dim * itemsize, 1)
    tb = max(target_bytes // row_bytes, 128)
    if batch >= 256:
        # At least 2 tiles so both TensorCores get work on v7x.
        tb = min(tb, _round_up(pl.cdiv(batch, 2), 128))
    tb = max(128, (tb // 128) * 128)
    if tb >= batch:
        tb = batch  # single tile: block dims equal full array dims
    return tb


def _vmem_limit_bytes(tb, dim, in_itemsize, vmem_capacity):
    """Derive the scoped-VMEM limit from the chosen tile size."""
    block = tb * dim * in_itemsize
    f32_block = tb * dim * 4
    pipeline = 3 * 2 * block          # 3 embedding inputs, double-buffered
    intermediates = 3 * f32_block     # upcast + diff + square (restructured)
    headroom = 4 * 1024 * 1024        # weights row, output, misc
    need = pipeline + intermediates + headroom
    cap = vmem_capacity - 8 * 1024 * 1024   # leave compiler internal scratch
    return int(max(32 * 1024 * 1024, min(need, cap)))


def attribute_weighted_triplet_loss(anchor, positive, negative, weights,
                                    *, margin=MARGIN, block_rows=None):
    """anchor/positive/negative: (B, D) (bf16 recommended); weights: (B,) f32.
    Returns the scalar mean of w[i] * triplet_margin_loss[i]."""
    B, D = anchor.shape
    # TODO(synk): if the production embedding dim is not a multiple of 128,
    # pad D to 128 once upstream to avoid partially-masked lane vregs.
    vmem_capacity = _vmem_capacity_bytes()
    tb = block_rows or _choose_block_rows(B, D, anchor.dtype.itemsize,
                                          vmem_capacity)
    num_tiles = pl.cdiv(B, tb)
    needs_mask = (B % tb) != 0

    # Lane-dense weight row, zero-padded so out-of-range rows contribute 0.
    w = weights.reshape(-1).astype(jnp.float32)
    pad = num_tiles * tb - B
    if pad:
        w = jnp.concatenate([w, jnp.zeros((pad,), jnp.float32)])
    w = w.reshape(1, num_tiles * tb)

    kernel = functools.partial(_weighted_triplet_kernel,
                               batch=B, block_rows=tb, margin=margin,
                               needs_mask=needs_mask)

    partial_sums = pl.pallas_call(
        kernel,
        out_shape=jax.ShapeDtypeStruct((num_tiles, 1, 128), jnp.float32),
        grid_spec=pltpu.PrefetchScalarGridSpec(
            num_scalar_prefetch=0,
            grid=(num_tiles,),
            in_specs=[
                pl.BlockSpec((1, tb), lambda i: (0, i)),    # weights (lane-dense)
                pl.BlockSpec((tb, D), lambda i: (i, 0)),    # anchor
                pl.BlockSpec((tb, D), lambda i: (i, 0)),    # positive
                pl.BlockSpec((tb, D), lambda i: (i, 0)),    # negative
            ],
            out_specs=pl.BlockSpec((1, 1, 128), lambda i: (i, 0, 0)),
        ),
        compiler_params=pltpu.CompilerParams(
            dimension_semantics=("parallel",),   # no cross-step accumulator
            vmem_limit_bytes=_vmem_limit_bytes(tb, D, anchor.dtype.itemsize,
                                               vmem_capacity),
        ),
    )(w, anchor, positive, negative)

    # Finish the mean in JAX, dividing by the true batch size.
    return jnp.sum(partial_sums[:, 0, 0]) / B


def compute_attribute_weights(anchor_color, neg_color, anchor_type, neg_type,
                              color_sim_mat, type_sim_mat,
                              alpha=ALPHA, beta=BETA):
    """Glue replacing the per-sample Python string-dict lookups.

    color_sim_mat / type_sim_mat are symmetric, so lookup(ac|nc) with
    fallback lookup(nc|ac) collapses to a single symmetric-matrix gather.
    """
    # TODO(synk): string-keyed dict lookup has no tensor equivalent; integer
    # attribute ids + similarity matrices stand in for it.
    c_sim = color_sim_mat[anchor_color, neg_color]
    t_sim = type_sim_mat[anchor_type, neg_type]
    return (1.0 + alpha * c_sim + beta * t_sim).astype(jnp.float32)   # (B,)


if __name__ == "__main__":
    key = jax.random.PRNGKey(0)
    B, D = 8, 32
    N_COLORS, N_TYPES = 6, 5

    k_a, k_p, k_n, k_cs, k_ts, k_ac, k_nc, k_at, k_nt = jax.random.split(key, 9)

    # Embeddings shipped as bf16 (bandwidth optimization); math stays f32.
    anchor = jax.random.normal(k_a, (B, D), dtype=jnp.float32).astype(jnp.bfloat16)
    positive = jax.random.normal(k_p, (B, D), dtype=jnp.float32).astype(jnp.bfloat16)
    negative = jax.random.normal(k_n, (B, D), dtype=jnp.float32).astype(jnp.bfloat16)

    # Deterministic synthetic symmetric similarity tables (stand-ins for the
    # color_sim / type_sim dicts passed to __init__).
    cs = jax.random.uniform(k_cs, (N_COLORS, N_COLORS), dtype=jnp.float32)
    color_sim_mat = 0.5 * (cs + cs.T)
    ts = jax.random.uniform(k_ts, (N_TYPES, N_TYPES), dtype=jnp.float32)
    type_sim_mat = 0.5 * (ts + ts.T)

    # Per-sample attribute ids (stand-ins for the string labels).
    anchor_color = jax.random.randint(k_ac, (B,), 0, N_COLORS)
    neg_color = jax.random.randint(k_nc, (B,), 0, N_COLORS)
    anchor_type = jax.random.randint(k_at, (B,), 0, N_TYPES)
    neg_type = jax.random.randint(k_nt, (B,), 0, N_TYPES)

    weights = compute_attribute_weights(
        anchor_color, neg_color, anchor_type, neg_type,
        color_sim_mat, type_sim_mat)

    loss = attribute_weighted_triplet_loss(anchor, positive, negative, weights)
    jax.block_until_ready(loss)

    # Pure-JAX reference of the same semantics (same bf16-quantized inputs).
    a32, p32, n32 = (x.astype(jnp.float32) for x in (anchor, positive, negative))
    d_ap = jnp.sqrt(jnp.sum((a32 - p32 + EPS) ** 2, axis=-1))
    d_an = jnp.sqrt(jnp.sum((a32 - n32 + EPS) ** 2, axis=-1))
    ref = jnp.mean(weights * jnp.maximum(d_ap - d_an + MARGIN, 0.0))
    assert jnp.allclose(loss, ref, rtol=1e-5, atol=1e-5), (loss, ref)

    print("KERNEL_OK")
</pallas_src>

<mosaic_0001>
module attributes {stable_mosaic.version = 11 : i64} {
  func.func @_weighted_triplet_kernel(%arg0: i32, %arg1: memref<1x8xf32, #tpu.memory_space<vmem>>, %arg2: memref<8x32xbf16, #tpu.memory_space<vmem>>, %arg3: memref<8x32xbf16, #tpu.memory_space<vmem>>, %arg4: memref<8x32xbf16, #tpu.memory_space<vmem>>, %arg5: memref<1x1x128xf32, #tpu.memory_space<vmem>>) attributes {dimension_semantics = [#tpu.dimension_semantics<parallel>], iteration_bounds = array<i64: 1>, scalar_prefetch = 0 : i64, scratch_operands = 0 : i64, tpu.core_type = #tpu.core_type<tc>, window_params = [{transform_indices = @transform_0, window_bounds = array<i64: 1, 8>}, {transform_indices = @transform_1, window_bounds = array<i64: 8, 32>}, {transform_indices = @transform_2, window_bounds = array<i64: 8, 32>}, {transform_indices = @transform_3, window_bounds = array<i64: 8, 32>}, {transform_indices = @transform_4, window_bounds = array<i64: 1, 1, 128>}]} {
    %c0 = arith.constant 0 : index
    %c0_0 = arith.constant 0 : index
    %0 = vector.load %arg2[%c0, %c0_0] : memref<8x32xbf16, #tpu.memory_space<vmem>>, vector<8x32xbf16>
    %1 = arith.extf %0 : vector<8x32xbf16> to vector<8x32xf32>
    %c0_1 = arith.constant 0 : index
    %c0_2 = arith.constant 0 : index
    %2 = vector.load %arg3[%c0_1, %c0_2] : memref<8x32xbf16, #tpu.memory_space<vmem>>, vector<8x32xbf16>
    %3 = arith.extf %2 : vector<8x32xbf16> to vector<8x32xf32>
    %4 = arith.subf %1, %3 : vector<8x32xf32>
    %cst = arith.constant 9.99999997E-7 : f32
    %5 = vector.broadcast %cst : f32 to vector<8x32xf32>
    %6 = arith.addf %4, %5 : vector<8x32xf32>
    %7 = arith.mulf %6, %6 : vector<8x32xf32>
    %cst_3 = arith.constant dense<0.000000e+00> : vector<8xf32>
    %8 = vector.multi_reduction <add>, %7, %cst_3 [1] : vector<8x32xf32> to vector<8xf32>
    %9 = vector.shape_cast %8 : vector<8xf32> to vector<8x1xf32>
    %10 = math.sqrt %9 : vector<8x1xf32>
    %c0_4 = arith.constant 0 : index
    %c0_5 = arith.constant 0 : index
    %11 = vector.load %arg4[%c0_4, %c0_5] : memref<8x32xbf16, #tpu.memory_space<vmem>>, vector<8x32xbf16>
    %12 = arith.extf %11 : vector<8x32xbf16> to vector<8x32xf32>
    %13 = arith.subf %1, %12 : vector<8x32xf32>
    %cst_6 = arith.constant 9.99999997E-7 : f32
    %14 = vector.broadcast %cst_6 : f32 to vector<8x32xf32>
    %15 = arith.addf %13, %14 : vector<8x32xf32>
    %16 = arith.mulf %15, %15 : vector<8x32xf32>
    %cst_7 = arith.constant dense<0.000000e+00> : vector<8xf32>
    %17 = vector.multi_reduction <add>, %16, %cst_7 [1] : vector<8x32xf32> to vector<8xf32>
    %18 = vector.shape_cast %17 : vector<8xf32> to vector<8x1xf32>
    %19 = math.sqrt %18 : vector<8x1xf32>
    %20 = arith.subf %10, %19 : vector<8x1xf32>
    %cst_8 = arith.constant 2.000000e-01 : f32
    %21 = vector.broadcast %cst_8 : f32 to vector<8x1xf32>
    %22 = arith.addf %20, %21 : vector<8x1xf32>
    %cst_9 = arith.constant 0.000000e+00 : f32
    %23 = vector.broadcast %cst_9 : f32 to vector<8x1xf32>
    %24 = arith.maximumf %22, %23 : vector<8x1xf32>
    %c0_10 = arith.constant 0 : index
    %c0_11 = arith.constant 0 : index
    %25 = vector.load %arg1[%c0_10, %c0_11] : memref<1x8xf32, #tpu.memory_space<vmem>>, vector<1x8xf32>
    %cst_12 = arith.constant dense<0.000000e+00> : vector<1x1xf32>
    %26 = tpu.matmul %25, %24, %cst_12 {dimension_numbers = #tpu.dot_dimension_numbers<[1], [0], [0], [1], [0, 0, 1, 1], [], []>} : vector<1x8xf32>, vector<8x1xf32>, vector<1x1xf32> -> vector<1x1xf32>
    %27 = vector.shape_cast %26 : vector<1x1xf32> to vector<1x1x1xf32>
    %28 = vector.broadcast %27 : vector<1x1x1xf32> to vector<1x1x128xf32>
    %c0_13 = arith.constant 0 : index
    %c0_14 = arith.constant 0 : index
    %c0_15 = arith.constant 0 : index
    %29 = vector.load %arg5[%c0_13, %c0_14, %c0_15] : memref<1x1x128xf32, #tpu.memory_space<vmem>>, vector<1x1x128xf32>
    tpu.vector_store %arg5[%c0_13, %c0_14, %c0_15], %28 {strides = array<i32>} : memref<1x1x128xf32, #tpu.memory_space<vmem>>, vector<1x1x128xf32>,
    return
  }
  func.func @transform_0(%arg0: i32) -> (i32, i32) {
    %c0_i32 = arith.constant 0 : i32
    %c0_i32_0 = arith.constant 0 : i32
    return %c0_i32, %arg0 : i32, i32
  }
  func.func @transform_1(%arg0: i32) -> (i32, i32) {
    %c0_i32 = arith.constant 0 : i32
    %c0_i32_0 = arith.constant 0 : i32
    return %arg0, %c0_i32 : i32, i32
  }
  func.func @transform_2(%arg0: i32) -> (i32, i32) {
    %c0_i32 = arith.constant 0 : i32
    %c0_i32_0 = arith.constant 0 : i32
    return %arg0, %c0_i32 : i32, i32
  }
  func.func @transform_3(%arg0: i32) -> (i32, i32) {
    %c0_i32 = arith.constant 0 : i32
    %c0_i32_0 = arith.constant 0 : i32
    return %arg0, %c0_i32 : i32, i32
  }
  func.func @transform_4(%arg0: i32) -> (i32, i32, i32) {
    %c0_i32 = arith.constant 0 : i32
    %c0_i32_0 = arith.constant 0 : i32
    %c0_i32_1 = arith.constant 0 : i32
    return %arg0, %c0_i32, %c0_i32_0 : i32, i32, i32
  }
}

</mosaic_0001>

<llo_original>
// kernel: tpu_custom_call.1
$region0: #{tpu_custom_call.1}
  #allocation0 [shape = 'u32[]', space=smem, size = 0x4, offset = 0x4, fixed_abs, tag = 'smem constant byte address 0x4 - core index']
  #allocation1 [shape = 'u32[72,128]{1,0:T(1,128)}', space=vmem, size = 0x9000, scoped, tag = 'internal scratch']
  %s0 = inlined_call_operand.hbm [shape: f32[1,8], index: 0, kind: input, shape index: {}]
  %s1 = inlined_call_operand.hbm [shape: bf16[8,32], index: 1, kind: input, shape index: {}]
  %s2 = inlined_call_operand.hbm [shape: bf16[8,32], index: 2, kind: input, shape index: {}]
  %s3 = inlined_call_operand.hbm [shape: bf16[8,32], index: 3, kind: input, shape index: {}]
  %s4 = inlined_call_operand.hbm [shape: f32[1,1,128], index: 4, kind: output, shape index: {}]
  %s5 = sld [smem:[#allocation0]]
  $region42: #{tpu_custom_call.1} parent=0
    _
  %s7 = ssub.s32 1, %s5
  %s8 = scalar_select 0, %s7, %s5
  $region1: #{tpu_custom_call.1} parent=0
    #allocation2 [shape = 'u8[512]{0}', space=vmem, size = 0x400, scoped, tag = 'input window, operand 0, single buffered']
    #allocation3 [shape = 's32[1]{0}', space=sflag, size = 0x4, scoped, tag = 'scoped memory for tpu_custom_call.1']
    #allocation4 [shape = 's32[1]{0}', space=sflag, size = 0x4, scoped, tag = 'scoped memory for tpu_custom_call.1']
    #allocation5 [shape = 'u8[2048]{0}', space=vmem, size = 0x800, scoped, tag = 'input window, operand 1, single buffered']
    #allocation6 [shape = 's32[1]{0}', space=sflag, size = 0x4, scoped, tag = 'scoped memory for tpu_custom_call.1']
    #allocation7 [shape = 'u8[2048]{0}', space=vmem, size = 0x800, scoped, tag = 'input window, operand 2, single buffered']
    #allocation8 [shape = 'u8[2048]{0}', space=vmem, size = 0x800, scoped, tag = 'input window, operand 3, single buffered']
    #allocation9 [shape = 's32[1]{0}', space=sflag, size = 0x4, scoped, tag = 'scoped memory for tpu_custom_call.1']
    #allocation10 [shape = 'u8[512]{0}', space=vmem, size = 0x400, scoped, tag = 'output window, operand 0, single buffered']
    %9 = vsyncpa [#allocation3], 0
    %10 = vsyncpa [#allocation6], 0
    %11 = vsyncpa [#allocation9], 0
    %12 = vsyncpa [#allocation4], 0
    // Predicated region
    $region2: #{tpu_custom_call.1} parent=1 // pred_check
      _
    $region3: #{tpu_custom_call.1} parent=1 // pred_check_branch
      %14 = sbr.rel (0) target = $region5
    $region4: #{tpu_custom_call.1} parent=1 // pred_region
      %16 = vsyncadd [#allocation3], 0
      %s18 = sshll.u32 %s0, 4
      %s19 = int_to_ptr.hbm [resolvable:$true] %s18
      %s20 = sshll.u32 [#allocation2], 4
      %s21 = int_to_ptr.vmem [resolvable:$true] %s20
      %23 = dma.hbm_to_vmem [thread:$0]  %s19, 16, %s21, [#allocation3]
    $region5: #{tpu_custom_call.1} parent=1 // pred_fallthru
      _
    // Predicated region
    $region6: #{tpu_custom_call.1} parent=1 // pred_check
      _
    $region7: #{tpu_custom_call.1} parent=1 // pred_check_branch
      %25 = sbr.rel (0) target = $region9
    $region8: #{tpu_custom_call.1} parent=1 // pred_region
      %27 = vsyncadd [#allocation6], 0
      %s29 = sshll.u32 %s1, 4
      %s30 = int_to_ptr.hbm [resolvable:$true] %s29
      %s31 = sshll.u32 [#allocation5], 4
      %s32 = int_to_ptr.vmem [resolvable:$true] %s31
      %34 = dma.hbm_to_vmem [thread:$0]  %s30, 64, %s32, [#allocation6]
    $region9: #{tpu_custom_call.1} parent=1 // pred_fallthru
      _
    // Predicated region
    $region10: #{tpu_custom_call.1} parent=1 // pred_check
      _
    $region11: #{tpu_custom_call.1} parent=1 // pred_check_branch
      %36 = sbr.rel (0) target = $region13
    $region12: #{tpu_custom_call.1} parent=1 // pred_region
      %38 = vsyncadd [#allocation6], 0
      %s40 = sshll.u32 %s2, 4
      %s41 = int_to_ptr.hbm [resolvable:$true] %s40
      %s42 = sshll.u32 [#allocation7], 4
      %s43 = int_to_ptr.vmem [resolvable:$true] %s42
      %45 = dma.hbm_to_vmem [thread:$0]  %s41, 64, %s43, [#allocation6]
    $region13: #{tpu_custom_call.1} parent=1 // pred_fallthru
      _
    // Predicated region
    $region14: #{tpu_custom_call.1} parent=1 // pred_check
      _
    $region15: #{tpu_custom_call.1} parent=1 // pred_check_branch
      %47 = sbr.rel (0) target = $region17
    $region16: #{tpu_custom_call.1} parent=1 // pred_region
      %49 = vsyncadd [#allocation9], 0
      %s51 = sshll.u32 %s3, 4
      %s52 = int_to_ptr.hbm [resolvable:$true] %s51
      %s53 = sshll.u32 [#allocation8], 4
      %s54 = int_to_ptr.vmem [resolvable:$true] %s53
      %56 = dma.hbm_to_vmem [thread:$0]  %s52, 64, %s54, [#allocation9]
    $region17: #{tpu_custom_call.1} parent=1 // pred_fallthru
      _
    // Predicated region
    $region18: #{tpu_custom_call.1} parent=1 // pred_check
      _
    $region19: #{tpu_custom_call.1} parent=1 // pred_check_branch
      %58 = sbr.rel (0) target = $region21
    $region20: #{tpu_custom_call.1} parent=1 // pred_region
      %60 = dma.done [#allocation3], 16
    $region21: #{tpu_custom_call.1} parent=1 // pred_fallthru
      _
    // Predicated region
    $region22: #{tpu_custom_call.1} parent=1 // pred_check
      _
    $region23: #{tpu_custom_call.1} parent=1 // pred_check_branch
      %62 = sbr.rel (0) target = $region25
    $region24: #{tpu_custom_call.1} parent=1 // pred_region
      %64 = dma.done [#allocation6], 64
    $region25: #{tpu_custom_call.1} parent=1 // pred_fallthru
      _
    // Predicated region
    $region26: #{tpu_custom_call.1} parent=1 // pred_check
      _
    $region27: #{tpu_custom_call.1} parent=1 // pred_check_branch
      %66 = sbr.rel (0) target = $region29
    $region28: #{tpu_custom_call.1} parent=1 // pred_region
      %68 = dma.done [#allocation6], 64
    $region29: #{tpu_custom_call.1} parent=1 // pred_fallthru
      _
    // Predicated region
    $region30: #{tpu_custom_call.1} parent=1 // pred_check
      _
    $region31: #{tpu_custom_call.1} parent=1 // pred_check_branch
      %70 = sbr.rel (0) target = $region33
    $region32: #{tpu_custom_call.1} parent=1 // pred_region
      %72 = dma.done [#allocation9], 64
    $region33: #{tpu_custom_call.1} parent=1 // pred_fallthru
      _
    %v73 = vld [vmem:[#allocation5] sm:$0xf]
    %v74 = vunpack.c.l.bf16 %v73
    %v75 = vld [vmem:[#allocation7] sm:$0xf]
    %v76 = vunpack.c.l.bf16 %v75
    %v77 = vsub.f32 %v74, %v76
    %v78 = vadd.f32 %v77, 1e-06
    %v79 = vmul.f32 %v78, %v78
    %vm80 = vcmask 261120
    %v81 = vsel %vm80, %v79, 0.0
    %82 = vadd.xlane.f32.xlu0 %v81
    %v83 = vpop.xlane.xlu0 %82
    %v84 = vrsqrt.pop %v83
    %v85 = vmul.f32 %v84, %v83
    %v86 = vmul.f32 %v85, %v84
    %v87 = vmul.f32 0.5, %v86
    %v88 = vsub.f32 1.5, %v87
    %v89 = vmul.f32 %v84, %v88
    %v90 = vmul.f32 %v83, %v89
    %vm91 = vcmp.eq.f32.partialorder %v83, inf
    %v92 = vsel %vm91, %v83, %v90
    %vm93 = vcmp.eq.f32.partialorder %v83, 0.0
    %v94 = vand.u32 %v83, 2147483648
    %v95 = vsel %vm93, %v94, %v92
    %v96 = vld [vmem:[#allocation8] sm:$0xf]
    %v97 = vunpack.c.l.bf16 %v96
    %v98 = vsub.f32 %v74, %v97
    %v99 = vadd.f32 %v98, 1e-06
    %v100 = vmul.f32 %v99, %v99
    %v101 = vsel %vm80, %v100, 0.0
    %102 = vadd.xlane.f32.xlu0 %v101
    %v103 = vpop.xlane.xlu0 %102
    %v104 = vrsqrt.pop %v103
    %v105 = vmul.f32 %v104, %v103
    %v106 = vmul.f32 %v105, %v104
    %v107 = vmul.f32 0.5, %v106
    %v108 = vsub.f32 1.5, %v107
    %v109 = vmul.f32 %v104, %v108
    %v110 = vmul.f32 %v103, %v109
    %vm111 = vcmp.eq.f32.partialorder %v103, inf
    %v112 = vsel %vm111, %v103, %v110
    %vm113 = vcmp.eq.f32.partialorder %v103, 0.0
    %v114 = vand.u32 %v103, 2147483648
    %v115 = vsel %vm113, %v114, %v112
    %v116 = vsub.f32 %v95, %v115
    %v117 = vadd.f32 %v116, 0.2
    %v118 = vmax.f32 %v117, 0.0
    %v119 = vld [vmem:[#allocation2] sm:$0x1]
    %vm120 = vcmask 64512
    %v122 = vsel %vm120, %v119, 0
    %124 = vmatpush.msra.mxu0 0.0
    %125 = vmatpush.msra.mxu0 0.0
    %126 = vmatpush.msra.mxu0 0.0
    %127 = vmatpush.msra.mxu0 0.0
    %128 = vmatpush.msra.mxu0 0.0
    %129 = vmatpush.msra.mxu0 0.0
    %130 = vmatpush.msra.mxu0 0.0
    %131 = vmatpush.msra.mxu0 0.0
    %132 = vmatpush.msra.mxu0 0.0
    %133 = vmatpush.msra.mxu0 0.0
    %134 = vmatpush.msra.mxu0 0.0
    %135 = vmatpush.msra.mxu0 0.0
    %136 = vmatpush.msra.mxu0 0.0
    %137 = vmatpush.msra.mxu0 0.0
    %138 = vmatpush.msra.mxu0 0.0
    %139 = vmatpush.msra.mxu0 %v118
    %140 = vmatmul.f32.gmra.mxu0 %v122
    %v141 = vpop.f32.mrf.mxu0
    %v142 = vadd.f32 0.0, %v141
    %143 = vdwg.mxu0
    %145 = vset.pattern.permute.xlu0 0
    %146 = vperm.xlu0 %145, %v142
    %v147 = vpop.permute.xlu0 %146
    %149 = vst [vmem:[#allocation10] sm:$0x1] %v147
    // Predicated region
    $region34: #{tpu_custom_call.1} parent=1 // pred_check
      _
    $region35: #{tpu_custom_call.1} parent=1 // pred_check_branch
      %151 = sbr.rel (0) target = $region37
    $region36: #{tpu_custom_call.1} parent=1 // pred_region
      %153 = vsyncadd [#allocation4], 0
      %s155 = sshll.u32 [#allocation10], 4
      %s156 = int_to_ptr.vmem [resolvable:$true] %s155
      %s157 = sshll.u32 %s4, 4
      %s158 = int_to_ptr.hbm [resolvable:$true] %s157
      %160 = dma.vmem_to_hbm [thread:$0]  %s156, 16, %s158, [#allocation4]
    $region37: #{tpu_custom_call.1} parent=1 // pred_fallthru
      _
    // Predicated region
    $region38: #{tpu_custom_call.1} parent=1 // pred_check
      _
    $region39: #{tpu_custom_call.1} parent=1 // pred_check_branch
      %162 = sbr.rel (0) target = $region41
    $region40: #{tpu_custom_call.1} parent=1 // pred_region
      %164 = dma.done [#allocation4], 16
    $region41: #{tpu_custom_call.1} parent=1 // pred_fallthru
      _
    %165 = vsyncpa [#allocation3], 1
    %166 = vsyncpa [#allocation6], 1
    %167 = vsyncpa [#allocation9], 1
    %168 = vsyncpa [#allocation4], 1

</llo_original>
